<compile_context>
chip_gen: v7x
topology: tpu7x:2x2x1
jax: 0.10.0
libtpu: 0.0.40
codegen_flags: <defaults>
</compile_context>

<pallas_src>
import functools

import jax
import jax.numpy as jnp
from jax.experimental import pallas as pl
from jax.experimental.pallas import tpu as pltpu


# ---------------------------------------------------------------------------
# Pallas kernel 1: SMP continuous kernel generation
#   phi_i(p) = relu(1 - ||p - mu_i||_1 / r_i); kernel = W @ phi, zero-mean over
#   the kernel support.  Tiny problem; one MXU matmul + an XLU lane reduction.
# ---------------------------------------------------------------------------
def _smp_kernel_gen_body(coords_ref, pcoord_ref, radius_ref, w_ref, o_ref,
                         *, dim_linear):
    coords = coords_ref[...]                       # (dim, K*K)  rel. positions
    pc = pcoord_ref[...]                           # (n_points, dim)
    n_points = pc.shape[0]
    kk = coords.shape[1]

    # L1 distance of every moving point to every kernel grid coordinate.
    dist = jnp.zeros((n_points, kk), jnp.float32)
    for d in range(dim_linear):                    # dim_linear is tiny & static
        dist = dist + jnp.abs(pc[:, d:d + 1] - coords[d:d + 1, :])

    # hat / linear-interpolation basis
    phi = jnp.maximum(1.0 - dist / radius_ref[...], 0.0)       # (n_points, K*K)

    # weighted sum of basis functions -> one kernel value per (out*in) plane
    ker = jnp.dot(w_ref[...], phi,
                  preferred_element_type=jnp.float32)          # (planes, K*K)

    # zero-mean kernel over its support (f32)
    ker = ker - jnp.mean(ker, axis=-1, keepdims=True)
    o_ref[...] = ker.astype(o_ref.dtype)


def generate_smp_kernel(coords, weight_coord, radius, weights, dim_linear):
    planes, _ = weights.shape
    kk = coords.shape[1]
    return pl.pallas_call(
        functools.partial(_smp_kernel_gen_body, dim_linear=dim_linear),
        out_shape=jax.ShapeDtypeStruct((planes, kk), jnp.float32),
        grid=(1,),
        in_specs=[
            pl.BlockSpec(coords.shape, lambda i: (0, 0)),
            pl.BlockSpec(weight_coord.shape, lambda i: (0, 0)),
            pl.BlockSpec(radius.shape, lambda i: (0, 0)),
            pl.BlockSpec(weights.shape, lambda i: (0, 0)),
        ],
        out_specs=pl.BlockSpec((planes, kk), lambda i: (0, 0)),
    )(coords, weight_coord, radius, weights)


# ---------------------------------------------------------------------------
# Pallas kernel 2: 'same' stride-1 2-D conv as a single im2col matmul
#   weight : (Cout, Cin*K*K)        bf16, resident (constant index_map)
#   patches: (1, Cin*K*K, HW_TILE)  bf16, lane axis = flattened spatial
#   bias   : (Cout, 1)              f32
#   out    : (1, Cout, HW_TILE)     lane-dense store
# ---------------------------------------------------------------------------
def _ckconv_mm_body(p_ref, w_ref, b_ref, o_ref):
    acc = jnp.dot(w_ref[...], p_ref[0],
                  preferred_element_type=jnp.float32)          # (Cout, HW_TILE) f32
    acc = acc + b_ref[...]                                     # f32 bias add
    o_ref[0] = acc.astype(o_ref.dtype)


def _pick_hw_tile(ckk, cout, hw, budget_bytes=8 * 1024 * 1024):
    """Largest 128-multiple spatial tile whose double-buffered blocks fit budget."""
    tile = 512
    while tile > 128 and 2 * (ckk * tile * 2 + cout * tile * 4) > budget_bytes:
        tile //= 2
    hw_ceil = 128 * pl.cdiv(hw, 128)               # multiple of 128
    return min(tile, hw_ceil)


def ckconv2d(x, conv_kernel, bias):
    """x: (N, Cin, H, W), conv_kernel: (Cout, Cin, K, K), bias: (Cout,)."""
    N, Cin, H, W = x.shape
    Cout, _, K, _ = conv_kernel.shape
    pad = K // 2                                    # 'same' padding, odd K
    HW = H * W
    CKK = Cin * K * K

    # im2col in the wrapper (XLA): (N, Cin*K*K, H*W), tap order (cin, kh, kw),
    # which matches the contiguous reshape of the (Cout, Cin, K, K) kernel.
    xp = jnp.pad(x, ((0, 0), (0, 0), (pad, pad), (pad, pad)))
    cols = [xp[:, :, kh:kh + H, kw:kw + W]
            for kh in range(K) for kw in range(K)]
    patches = jnp.stack(cols, axis=2).reshape(N, CKK, HW)

    # Lane-pad the flattened spatial dim to a multiple of the tile.
    hw_tile = _pick_hw_tile(CKK, Cout, HW)
    HWp = hw_tile * pl.cdiv(HW, hw_tile)
    if HWp != HW:
        patches = jnp.pad(patches, ((0, 0), (0, 0), (0, HWp - HW)))

    # bf16 matmul operands, f32 accumulation / bias.
    patches = patches.astype(jnp.bfloat16)
    w2 = conv_kernel.reshape(Cout, CKK).astype(jnp.bfloat16)   # contiguous reshape
    b2 = bias.reshape(Cout, 1).astype(jnp.float32)

    out = pl.pallas_call(
        _ckconv_mm_body,
        out_shape=jax.ShapeDtypeStruct((N, Cout, HWp), x.dtype),
        grid=(N, HWp // hw_tile),
        in_specs=[
            pl.BlockSpec((1, CKK, hw_tile), lambda n, t: (n, 0, t)),
            pl.BlockSpec((Cout, CKK), lambda n, t: (0, 0)),
            pl.BlockSpec((Cout, 1), lambda n, t: (0, 0)),
        ],
        out_specs=pl.BlockSpec((1, Cout, hw_tile), lambda n, t: (n, 0, t)),
        compiler_params=pltpu.CompilerParams(
            dimension_semantics=("parallel", "parallel"),
            vmem_limit_bytes=32 * 1024 * 1024),
    )(patches, w2, b2)

    return out[:, :, :HW].reshape(N, Cout, H, W)


# ---------------------------------------------------------------------------
# CKConv forward (glue in plain JAX, hot paths in Pallas)
# ---------------------------------------------------------------------------
def ckconv_forward(x, params, *, horizon, dim_linear):
    # handle_rel_positions: grid of relative positions in [-1, 1]^dim, 'ij' meshgrid
    lin = jnp.linspace(-1.0, 1.0, horizon)
    grids = jnp.meshgrid(*([lin] * dim_linear), indexing="ij")
    rel_pos = jnp.stack(grids, axis=0)                       # (dim, K, K)
    coords = rel_pos.reshape(dim_linear, -1)                 # (dim, K*K)

    # Kernel(rel_pos).view(-1, Cin, K, K)
    planes_kernel = generate_smp_kernel(coords,
                                        params["weight_coord"],
                                        params["radius"],
                                        params["weights"],
                                        dim_linear)
    Cin = x.shape[1]
    Cout = params["weights"].shape[0] // Cin
    conv_kernel = planes_kernel.reshape(Cout, Cin, horizon, horizon)

    # self.conv(x, conv_kernel, self.bias)  -> same-padded stride-1 conv2d
    return ckconv2d(x, conv_kernel, params["bias"]), conv_kernel


if __name__ == "__main__":
    # Small shapes consistent with the module (images, dim_linear=2).
    N, Cin, Cout, H, W = 2, 4, 8, 16, 16
    horizon = 5                       # odd, as required by handle_rel_positions
    dim_linear = 2
    n_points = 36
    kernel_radius = 1.0               # constructor arg (default 0.002 is degenerate at K=5)
    coord_std = 0.1

    key = jax.random.PRNGKey(0)
    kx, kc, kw = jax.random.split(key, 3)

    x = jax.random.normal(kx, (N, Cin, H, W), jnp.float32)

    params = {
        # SMPKernel parameters
        "weight_coord": coord_std * jax.random.normal(kc, (n_points, dim_linear),
                                                      jnp.float32),
        "radius": jnp.full((n_points, 1), kernel_radius, jnp.float32),
        "weights": 0.02 * jax.random.normal(kw, (Cout * Cin, n_points),
                                            jnp.float32),
        # CKConv bias: initialized to 0.0 (as in the module)
        "bias": jnp.zeros((Cout,), jnp.float32),
    }

    out, conv_kernel = ckconv_forward(x, params, horizon=horizon,
                                      dim_linear=dim_linear)
    out = jax.block_until_ready(out)

    # Sanity check of the Pallas conv against XLA's conv with the same
    # bf16-quantized operands (the Pallas matmul runs bf16 x bf16 -> f32).
    x_q = x.astype(jnp.bfloat16).astype(jnp.float32)
    k_q = conv_kernel.astype(jnp.bfloat16).astype(jnp.float32)
    ref = jax.lax.conv_general_dilated(
        x_q, k_q, window_strides=(1, 1), padding="SAME",
        dimension_numbers=("NCHW", "OIHW", "NCHW"),
        precision=jax.lax.Precision.HIGHEST,
    ) + params["bias"].reshape(1, Cout, 1, 1)
    assert out.shape == (N, Cout, H, W)
    assert jnp.allclose(out, ref, atol=2e-3, rtol=2e-3), "conv mismatch vs XLA ref"

    print("KERNEL_OK")
</pallas_src>

<mosaic_0001>
module attributes {stable_mosaic.version = 11 : i64} {
  func.func @_smp_kernel_gen_body(%arg0: i32, %arg1: memref<2x25xf32, #tpu.memory_space<vmem>>, %arg2: memref<36x2xf32, #tpu.memory_space<vmem>>, %arg3: memref<36x1xf32, #tpu.memory_space<vmem>>, %arg4: memref<32x36xf32, #tpu.memory_space<vmem>>, %arg5: memref<32x25xf32, #tpu.memory_space<vmem>>) attributes {dimension_semantics = [#tpu.dimension_semantics<arbitrary>], iteration_bounds = array<i64: 1>, scalar_prefetch = 0 : i64, scratch_operands = 0 : i64, tpu.core_type = #tpu.core_type<tc>, window_params = [{pipeline_mode = #tpu.pipeline_mode<synchronous>, transform_indices = @transform_0, window_bounds = array<i64: 2, 25>}, {pipeline_mode = #tpu.pipeline_mode<synchronous>, transform_indices = @transform_1, window_bounds = array<i64: 36, 2>}, {pipeline_mode = #tpu.pipeline_mode<synchronous>, transform_indices = @transform_2, window_bounds = array<i64: 36, 1>}, {pipeline_mode = #tpu.pipeline_mode<synchronous>, transform_indices = @transform_3, window_bounds = array<i64: 32, 36>}, {pipeline_mode = #tpu.pipeline_mode<synchronous>, transform_indices = @transform_4, window_bounds = array<i64: 32, 25>}]} {
    %c0 = arith.constant 0 : index
    %c0_0 = arith.constant 0 : index
    %0 = vector.load %arg1[%c0, %c0_0] : memref<2x25xf32, #tpu.memory_space<vmem>>, vector<2x25xf32>
    %c0_1 = arith.constant 0 : index
    %c0_2 = arith.constant 0 : index
    %1 = vector.load %arg2[%c0_1, %c0_2] : memref<36x2xf32, #tpu.memory_space<vmem>>, vector<36x2xf32>
    %cst = arith.constant 0.000000e+00 : f32
    %2 = vector.broadcast %cst : f32 to vector<36x25xf32>
    %3 = vector.extract_strided_slice %1 {offsets = [0, 0], sizes = [36, 1], strides = [1, 1]} : vector<36x2xf32> to vector<36x1xf32>
    %4 = vector.extract_strided_slice %0 {offsets = [0, 0], sizes = [1, 25], strides = [1, 1]} : vector<2x25xf32> to vector<1x25xf32>
    %5 = vector.broadcast %3 : vector<36x1xf32> to vector<36x25xf32>
    %6 = vector.broadcast %4 : vector<1x25xf32> to vector<36x25xf32>
    %7 = arith.subf %5, %6 : vector<36x25xf32>
    %8 = math.absf %7 : vector<36x25xf32>
    %9 = arith.addf %2, %8 : vector<36x25xf32>
    %10 = vector.extract_strided_slice %1 {offsets = [0, 1], sizes = [36, 1], strides = [1, 1]} : vector<36x2xf32> to vector<36x1xf32>
    %11 = vector.extract_strided_slice %0 {offsets = [1, 0], sizes = [1, 25], strides = [1, 1]} : vector<2x25xf32> to vector<1x25xf32>
    %12 = vector.broadcast %10 : vector<36x1xf32> to vector<36x25xf32>
    %13 = vector.broadcast %11 : vector<1x25xf32> to vector<36x25xf32>
    %14 = arith.subf %12, %13 : vector<36x25xf32>
    %15 = math.absf %14 : vector<36x25xf32>
    %16 = arith.addf %9, %15 : vector<36x25xf32>
    %c0_3 = arith.constant 0 : index
    %c0_4 = arith.constant 0 : index
    %17 = vector.load %arg3[%c0_3, %c0_4] : memref<36x1xf32, #tpu.memory_space<vmem>>, vector<36x1xf32>
    %18 = vector.broadcast %17 : vector<36x1xf32> to vector<36x25xf32>
    %19 = arith.divf %16, %18 : vector<36x25xf32>
    %cst_5 = arith.constant 1.000000e+00 : f32
    %20 = vector.broadcast %cst_5 : f32 to vector<36x25xf32>
    %21 = arith.subf %20, %19 : vector<36x25xf32>
    %cst_6 = arith.constant 0.000000e+00 : f32
    %22 = vector.broadcast %cst_6 : f32 to vector<36x25xf32>
    %23 = arith.maximumf %21, %22 : vector<36x25xf32>
    %c0_7 = arith.constant 0 : index
    %c0_8 = arith.constant 0 : index
    %24 = vector.load %arg4[%c0_7, %c0_8] : memref<32x36xf32, #tpu.memory_space<vmem>>, vector<32x36xf32>
    %cst_9 = arith.constant dense<0.000000e+00> : vector<32x25xf32>
    %25 = tpu.matmul %24, %23, %cst_9 {dimension_numbers = #tpu.dot_dimension_numbers<[1], [0], [0], [1], [0, 0, 1, 1], [], []>} : vector<32x36xf32>, vector<36x25xf32>, vector<32x25xf32> -> vector<32x25xf32>
    %cst_10 = arith.constant dense<0.000000e+00> : vector<32xf32>
    %26 = vector.multi_reduction <add>, %25, %cst_10 [1] : vector<32x25xf32> to vector<32xf32>
    %27 = vector.shape_cast %26 : vector<32xf32> to vector<32x1xf32>
    %cst_11 = arith.constant 2.500000e+01 : f32
    %28 = vector.broadcast %cst_11 : f32 to vector<32x1xf32>
    %29 = arith.divf %27, %28 : vector<32x1xf32>
    %30 = vector.broadcast %29 : vector<32x1xf32> to vector<32x25xf32>
    %31 = arith.subf %25, %30 : vector<32x25xf32>
    %c0_12 = arith.constant 0 : index
    %c0_13 = arith.constant 0 : index
    %32 = vector.load %arg5[%c0_12, %c0_13] : memref<32x25xf32, #tpu.memory_space<vmem>>, vector<32x25xf32>
    tpu.vector_store %arg5[%c0_12, %c0_13], %31 {strides = array<i32>} : memref<32x25xf32, #tpu.memory_space<vmem>>, vector<32x25xf32>,
    return
  }
  func.func @transform_0(%arg0: i32) -> (i32, i32) {
    %c0_i32 = arith.constant 0 : i32
    %c0_i32_0 = arith.constant 0 : i32
    %c0_i32_1 = arith.constant 0 : i32
    return %c0_i32, %c0_i32_0 : i32, i32
  }
  func.func @transform_1(%arg0: i32) -> (i32, i32) {
    %c0_i32 = arith.constant 0 : i32
    %c0_i32_0 = arith.constant 0 : i32
    %c0_i32_1 = arith.constant 0 : i32
    return %c0_i32, %c0_i32_0 : i32, i32
  }
  func.func @transform_2(%arg0: i32) -> (i32, i32) {
    %c0_i32 = arith.constant 0 : i32
    %c0_i32_0 = arith.constant 0 : i32
    %c0_i32_1 = arith.constant 0 : i32
    return %c0_i32, %c0_i32_0 : i32, i32
  }
  func.func @transform_3(%arg0: i32) -> (i32, i32) {
    %c0_i32 = arith.constant 0 : i32
    %c0_i32_0 = arith.constant 0 : i32
    %c0_i32_1 = arith.constant 0 : i32
    return %c0_i32, %c0_i32_0 : i32, i32
  }
  func.func @transform_4(%arg0: i32) -> (i32, i32) {
    %c0_i32 = arith.constant 0 : i32
    %c0_i32_0 = arith.constant 0 : i32
    %c0_i32_1 = arith.constant 0 : i32
    return %c0_i32, %c0_i32_0 : i32, i32
  }
}

</mosaic_0001>

<llo_original>
// kernel: tpu_custom_call.1
$region0: #{tpu_custom_call.1}
  #allocation0 [shape = 'u32[]', space=smem, size = 0x4, offset = 0x4, fixed_abs, tag = 'smem constant byte address 0x4 - core index']
  #allocation1 [shape = 'u32[144,128]{1,0:T(1,128)}', space=vmem, size = 0x12000, scoped, tag = 'internal scratch']
  %s0 = inlined_call_operand.vmem [shape: f32[2,25], index: 0, kind: input, shape index: {}]
  %s1 = inlined_call_operand.vmem [shape: f32[36,2], index: 1, kind: input, shape index: {}]
  %s2 = inlined_call_operand.vmem [shape: f32[36,1], index: 2, kind: input, shape index: {}]
  %s3 = inlined_call_operand.vmem [shape: f32[32,36], index: 3, kind: input, shape index: {}]
  %s4 = inlined_call_operand.hbm [shape: f32[32,25], index: 4, kind: output, shape index: {}]
  %s5 = sld [smem:[#allocation0]]
  $region26: #{tpu_custom_call.1} parent=0
    _
  %s7 = ssub.s32 1, %s5
  %s8 = scalar_select 0, %s7, %s5
  $region1: #{tpu_custom_call.1} parent=0
    #allocation2 [shape = 'u8[16384]{0}', space=vmem, size = 0x4000, scoped, tag = 'output window, operand 0, single buffered']
    #allocation3 [shape = 's32[1]{0}', space=sflag, size = 0x4, scoped, tag = 'scoped memory for tpu_custom_call.1']
    %9 = vsyncpa [#allocation3], 0
    // Predicated region
    $region2: #{tpu_custom_call.1} parent=1 // pred_check
      _
    $region3: #{tpu_custom_call.1} parent=1 // pred_check_branch
      %11 = sbr.rel (0) target = $region5
    $region4: #{tpu_custom_call.1} parent=1 // pred_region
      _
    $region5: #{tpu_custom_call.1} parent=1 // pred_fallthru
      _
    // Predicated region
    $region6: #{tpu_custom_call.1} parent=1 // pred_check
      _
    $region7: #{tpu_custom_call.1} parent=1 // pred_check_branch
      %13 = sbr.rel (0) target = $region9
    $region8: #{tpu_custom_call.1} parent=1 // pred_region
      _
    $region9: #{tpu_custom_call.1} parent=1 // pred_fallthru
      _
    // Predicated region
    $region10: #{tpu_custom_call.1} parent=1 // pred_check
      _
    $region11: #{tpu_custom_call.1} parent=1 // pred_check_branch
      %15 = sbr.rel (0) target = $region13
    $region12: #{tpu_custom_call.1} parent=1 // pred_region
      _
    $region13: #{tpu_custom_call.1} parent=1 // pred_fallthru
      _
    // Predicated region
    $region14: #{tpu_custom_call.1} parent=1 // pred_check
      _
    $region15: #{tpu_custom_call.1} parent=1 // pred_check_branch
      %17 = sbr.rel (0) target = $region17
    $region16: #{tpu_custom_call.1} parent=1 // pred_region
      _
    $region17: #{tpu_custom_call.1} parent=1 // pred_fallthru
      _
    %v18 = vld [vmem:[%s0] sm:$0x3]
    %v19 = vld [vmem:[%s1] sm:$0xff]
    %v20 = vld [vmem:[%s1 + $0x8] sm:$0xff]
    %v21 = vld [vmem:[%s1 + $0x10] sm:$0xff]
    %v22 = vld [vmem:[%s1 + $0x18] sm:$0xff]
    %v23 = vld [vmem:[%s1 + $0x20] sm:$0xf]
    %25 = vset.pattern.permute.xlu0 0
    %26 = vperm.xlu0 %25, %v19
    %v27 = vpop.permute.xlu0 %26
    %30 = vset.pattern.permute.xlu0 0
    %31 = vperm.xlu0 %30, %v20
    %v32 = vpop.permute.xlu0 %31
    %35 = vset.pattern.permute.xlu0 0
    %36 = vperm.xlu0 %35, %v21
    %v37 = vpop.permute.xlu0 %36
    %40 = vset.pattern.permute.xlu0 0
    %41 = vperm.xlu0 %40, %v22
    %v42 = vpop.permute.xlu0 %41
    %45 = vset.pattern.permute.xlu0 0
    %46 = vperm.xlu0 %45, %v23
    %v47 = vpop.permute.xlu0 %46
    %v49 = vlaneseq
    %v50 = vshrl.u32 %v49, 7
    %v51 = vsub.s32 0, %v50
    %v52 = vrot.slane %v18, %v51
    %v53 = vsub.f32 %v27, %v52
    %v54 = vsub.f32 %v32, %v52
    %v55 = vsub.f32 %v37, %v52
    %v56 = vsub.f32 %v42, %v52
    %v57 = vsub.f32 %v47, %v52
    %v58 = vand.u32 2147483647, %v53
    %v59 = vand.u32 2147483647, %v54
    %v60 = vand.u32 2147483647, %v55
    %v61 = vand.u32 2147483647, %v56
    %v62 = vand.u32 2147483647, %v57
    %v63 = vadd.f32 %v58, 0.0
    %v64 = vadd.f32 %v59, 0.0
    %v65 = vadd.f32 %v60, 0.0
    %v66 = vadd.f32 %v61, 0.0
    %v67 = vadd.f32 %v62, 0.0
    %68 = vset.pattern.permute.xlu0 1
    %69 = vperm.xlu0 %68, %v19
    %v70 = vpop.permute.xlu0 %69
    %72 = vset.pattern.permute.xlu0 1
    %73 = vperm.xlu0 %72, %v20
    %v74 = vpop.permute.xlu0 %73
    %76 = vset.pattern.permute.xlu0 1
    %77 = vperm.xlu0 %76, %v21
    %v78 = vpop.permute.xlu0 %77
    %80 = vset.pattern.permute.xlu0 1
    %81 = vperm.xlu0 %80, %v22
    %v82 = vpop.permute.xlu0 %81
    %84 = vset.pattern.permute.xlu0 1
    %85 = vperm.xlu0 %84, %v23
    %v86 = vpop.permute.xlu0 %85
    %v88 = vlaneseq
    %v89 = vshrl.u32 %v88, 7
    %v90 = vsub.s32 1, %v89
    %v91 = vrot.slane %v18, %v90
    %v92 = vsub.f32 %v70, %v91
    %v93 = vsub.f32 %v74, %v91
    %v94 = vsub.f32 %v78, %v91
    %v95 = vsub.f32 %v82, %v91
    %v96 = vsub.f32 %v86, %v91
    %v97 = vand.u32 2147483647, %v92
    %v98 = vand.u32 2147483647, %v93
    %v99 = vand.u32 2147483647, %v94
    %v100 = vand.u32 2147483647, %v95
    %v101 = vand.u32 2147483647, %v96
    %v102 = vadd.f32 %v63, %v97
    %v103 = vadd.f32 %v64, %v98
    %v104 = vadd.f32 %v65, %v99
    %v105 = vadd.f32 %v66, %v100
    %v106 = vadd.f32 %v67, %v101
    %v107 = vld [vmem:[%s2] sm:$0xff]
    %v108 = vld [vmem:[%s2 + $0x8] sm:$0xff]
    %v109 = vld [vmem:[%s2 + $0x10] sm:$0xff]
    %v110 = vld [vmem:[%s2 + $0x18] sm:$0xff]
    %v111 = vld [vmem:[%s2 + $0x20] sm:$0xf]
    %113 = vset.pattern.permute.xlu0 0
    %114 = vperm.xlu0 %113, %v107
    %v115 = vpop.permute.xlu0 %114
    %118 = vset.pattern.permute.xlu0 0
    %119 = vperm.xlu0 %118, %v108
    %v120 = vpop.permute.xlu0 %119
    %123 = vset.pattern.permute.xlu0 0
    %124 = vperm.xlu0 %123, %v109
    %v125 = vpop.permute.xlu0 %124
    %128 = vset.pattern.permute.xlu0 0
    %129 = vperm.xlu0 %128, %v110
    %v130 = vpop.permute.xlu0 %129
    %133 = vset.pattern.permute.xlu0 0
    %134 = vperm.xlu0 %133, %v111
    %v135 = vpop.permute.xlu0 %134
    %v137 = vrcp.pop %v115
    %v138 = vmul.f32 %v102, %v137
    %v139 = vrcp.pop %v120
    %v140 = vmul.f32 %v103, %v139
    %v141 = vrcp.pop %v125
    %v142 = vmul.f32 %v104, %v141
    %v143 = vrcp.pop %v130
    %v144 = vmul.f32 %v105, %v143
    %v145 = vrcp.pop %v135
    %v146 = vmul.f32 %v106, %v145
    %v147 = vsub.f32 1.0, %v138
    %v148 = vsub.f32 1.0, %v140
    %v149 = vsub.f32 1.0, %v142
    %v150 = vsub.f32 1.0, %v144
    %v151 = vsub.f32 1.0, %v146
    %v152 = vmax.f32 %v147, 0.0
    %v153 = vmax.f32 %v148, 0.0
    %v154 = vmax.f32 %v149, 0.0
    %v155 = vmax.f32 %v150, 0.0
    %v156 = vmax.f32 %v151, 0.0
    %v157 = vld [vmem:[%s3] sm:$0xff]
    %v158 = vld [vmem:[%s3 + $0x8] sm:$0xff]
    %v159 = vld [vmem:[%s3 + $0x10] sm:$0xff]
    %v160 = vld [vmem:[%s3 + $0x18] sm:$0xff]
    %vm161 = vcmask 293888
    %v163 = vsel %vm161, %v157, 0
    %v166 = vsel %vm161, %v158, 0
    %v169 = vsel %vm161, %v159, 0
    %v172 = vsel %vm161, %v160, 0
    %vm174 = vcmask 1043456
    %v176 = vsel %vm174, %v156, 0
    %178 = vmatprep.subr.mxu0 0.0
    %179 = vmatpush1.msra.mxu0 %v152
    %180 = vmatprep.subr.mxu0 0.0
    %181 = vmatpush1.msra.mxu0 %v153
    %182 = vmatprep.subr.mxu0 0.0
    %183 = vmatpush1.msra.mxu0 %v154
    %184 = vmatprep.subr.mxu0 0.0
    %185 = vmatpush1.msra.mxu0 %v155
    %186 = vmatprep.subr.mxu0 0.0
    %187 = vmatpush1.msra.mxu0 %v176
    %188 = vmatprep.subr.mxu0 0.0
    %189 = vmatpush1.msra.mxu0 0.0
    %190 = vmatprep.subr.mxu0 0.0
    %191 = vmatpush1.msra.mxu0 0.0
    %192 = vmatprep.subr.mxu0 0.0
    %193 = vmatpush1.msra.mxu0 0.0
    %194 = vmatprep.subr.mxu0 0.0
    %195 = vmatpush1.msra.mxu0 0.0
    %196 = vmatprep.subr.mxu0 0.0
    %197 = vmatpush1.msra.mxu0 0.0
    %198 = vmatprep.subr.mxu0 0.0
    %199 = vmatpush1.msra.mxu0 0.0
    %200 = vmatprep.subr.mxu0 0.0
    %201 = vmatpush1.msra.mxu0 0.0
    %202 = vmatprep.subr.mxu0 0.0
    %203 = vmatpush1.msra.mxu0 0.0
    %204 = vmatprep.subr.mxu0 0.0
    %205 = vmatpush1.msra.mxu0 0.0
    %206 = vmatprep.subr.mxu0 0.0
    %207 = vmatpush1.msra.mxu0 0.0
    %208 = vmatprep.subr.mxu0 0.0
    %209 = vmatpush1.msra.mxu0 0.0
    %210 = vmatprep.subr.mxu0 0.0
    %211 = vmatpush1.msra.mxu0 0.0
    %212 = vmatprep.subr.mxu0 0.0
    %213 = vmatpush1.msra.mxu0 0.0
    %214 = vmatprep.subr.mxu0 0.0
    %215 = vmatpush1.msra.mxu0 0.0
    %216 = vmatprep.subr.mxu0 0.0
    %217 = vmatpush1.msra.mxu0 0.0
    %218 = vmatprep.subr.mxu0 0.0
    %219 = vmatpush1.msra.mxu0 0.0
    %220 = vmatprep.subr.mxu0 0.0
    %221 = vmatpush1.msra.mxu0 0.0
    %222 = vmatprep.subr.mxu0 0.0
    %223 = vmatpush1.msra.mxu0 0.0
    %224 = vmatprep.subr.mxu0 0.0
    %225 = vmatpush1.msra.mxu0 0.0
    %226 = vmatprep.subr.mxu0 0.0
    %227 = vmatpush1.msra.mxu0 0.0
    %228 = vmatprep.subr.mxu0 0.0
    %229 = vmatpush1.msra.mxu0 0.0
    %230 = vmatprep.subr.mxu0 0.0
    %231 = vmatpush1.msra.mxu0 0.0
    %232 = vmatprep.subr.mxu0 0.0
    %233 = vmatpush1.msra.mxu0 0.0
    %234 = vmatprep.subr.mxu0 0.0
    %235 = vmatpush1.msra.mxu0 0.0
    %236 = vmatprep.subr.mxu0 0.0
    %237 = vmatpush1.msra.mxu0 0.0
    %238 = vmatprep.subr.mxu0 0.0
    %239 = vmatpush1.msra.mxu0 0.0
    %240 = vmatprep.subr.mxu0 0.0
    %241 = vmatpush1.msra.mxu0 0.0
    %242 = vmatprep.mubr.f32.mxu0 0.0
    %243 = vmatmul.mubr.f32.gmra.mrb[0].mxu0 %v163
    %v244 = vpop.f32.mrb[0].mxu0
    %v245 = vadd.f32 0.0, %v244
    %v246 = vpop.f32.mrb[0].mxu0
    %247 = vmatprep.mubr.f32.mxu0 0.0
    %248 = vmatmul.mubr.f32.gmra.mrb[0].mxu0 %v166
    %v249 = vpop.f32.mrb[0].mxu0
    %v250 = vadd.f32 0.0, %v249
    %v251 = vpop.f32.mrb[0].mxu0
    %252 = vmatprep.mubr.f32.mxu0 0.0
    %253 = vmatmul.mubr.f32.gmra.mrb[0].mxu0 %v169
    %v254 = vpop.f32.mrb[0].mxu0
    %v255 = vadd.f32 0.0, %v254
    %v256 = vpop.f32.mrb[0].mxu0
    %257 = vmatprep.mubr.f32.mxu0 0.0
    %258 = vmatmul.mubr.f32.gmra.mrb[0].mxu0 %v172
    %v259 = vpop.f32.mrb[0].mxu0
    %v260 = vadd.f32 0.0, %v259
    %v261 = vpop.f32.mrb[0].mxu0
    %262 = vdwg.mxu0
    %vm263 = vcmask 203776
    %v264 = vsel %vm263, %v245, 0.0
    %265 = vadd.xlane.f32.xlu0 %v264
    %v266 = vpop.xlane.xlu0 %265
    %v267 = vsel %vm263, %v250, 0.0
    %268 = vadd.xlane.f32.xlu0 %v267
    %v269 = vpop.xlane.xlu0 %268
    %v270 = vsel %vm263, %v255, 0.0
    %271 = vadd.xlane.f32.xlu0 %v270
    %v272 = vpop.xlane.xlu0 %271
    %v273 = vsel %vm263, %v260, 0.0
    %274 = vadd.xlane.f32.xlu0 %v273
    %v275 = vpop.xlane.xlu0 %274
    %v276 = vrcp.pop 25.0
    %v277 = vmul.f32 %v266, %v276
    %v278 = vmul.f32 %v269, %v276
    %v279 = vmul.f32 %v272, %v276
    %v280 = vmul.f32 %v275, %v276
    %v281 = vsub.f32 %v245, %v277
    %v282 = vsub.f32 %v250, %v278
    %v283 = vsub.f32 %v255, %v279
    %v284 = vsub.f32 %v260, %v280
    %285 = vst.msk [vmem:[#allocation2] sm:$0xff] %vm263, %v281
    %286 = vst.msk [vmem:[#allocation2 + $0x8] sm:$0xff] %vm263, %v282
    %287 = vst.msk [vmem:[#allocation2 + $0x10] sm:$0xff] %vm263, %v283
    %288 = vst.msk [vmem:[#allocation2 + $0x18] sm:$0xff] %vm263, %v284
    // Predicated region
    $region18: #{tpu_custom_call.1} parent=1 // pred_check
      _
    $region19: #{tpu_custom_call.1} parent=1 // pred_check_branch
      %290 = sbr.rel (0) target = $region21
    $region20: #{tpu_custom_call.1} parent=1 // pred_region
      %s292 = ssub.s32 512, 512
      %293 = vsyncadd [#allocation3], %s292
      %s294 = sshll.u32 [#allocation2], 4
      %s295 = int_to_ptr.vmem [resolvable:$true] %s294
      %300 = dma.vmem_to_hbm [thread:$0]  %s295, 512, %s4, [#allocation3], 128, 128, 8
    $region21: #{tpu_custom_call.1} parent=1 // pred_fallthru
      _
    // Predicated region
    $region22: #{tpu_custom_call.1} parent=1 // pred_check
      _
    $region23: #{tpu_custom_call.1} parent=1 // pred_check_branch
      %302 = sbr.rel (0) target = $region25
    $region24: #{tpu_custom_call.1} parent=1 // pred_region
      %303 = dma.done [#allocation3], 512
    $region25: #{tpu_custom_call.1} parent=1 // pred_fallthru
      _
    %304 = vsyncpa [#allocation3], 1

</llo_original>
